<compile_context>
chip_gen: v6e
topology: v6e:2x2x1
jax: 0.10.0
libtpu: 0.0.40
codegen_flags: <defaults>
</compile_context>

<pallas_src>
import functools

import jax
import jax.numpy as jnp
from jax.experimental import pallas as pl
from jax.experimental.pallas import tpu as pltpu


def _round_up(v, m):
    return -(-v // m) * m


def kinome_gnn_kernel(adj_ref, x_ref, deginv_ref, batch_ref, vec_ref, w2_ref,
                      scal_ref, out_ref, h1_ref, m_ref, l_ref, n_ref,
                      *, tile_n, hidden, g_pad):
    """Fused 2-phase forward over dst-row blocks.

    grid = (2, num_row_blocks); phase 0 = layer 1, phase 1 = layer 2 + pooling.

    adj_ref   : [TILE_N, Np] bf16  raw 0/1 adjacency row block (dst rows, all src cols)
    x_ref     : [Np, 1]      f32   node features (Fin = 1), fully resident
    deginv_ref: [TILE_N, 1]  f32   1 / max(in_degree, 1) for this row block
    batch_ref : [TILE_N, 1]  i32   graph id per node (-1 for padded rows)
    vec_ref   : [8, H]       f32   packed params (BN folded):
                  row 0: w1_l*bn1_scale  row 1: w1_r*bn1_scale
                  row 2: shift1          row 3: shift2
                  row 4: gate_w          row 5: lin_w
    w2_ref    : [2H, H]      bf16  vstack([w2_l, w2_r]) * bn2_scale
    scal_ref  : [2]          f32   (gate_b, lin_b) in SMEM
    out_ref   : [1, Gp]      f32   sigmoid(lin(attention_pool(h2)))  (lane-dense)
    h1_ref    : [Np, H]      f32   VMEM scratch, persists across grid steps
    m/l/n_ref : [1, Gp]      f32   online per-graph softmax max / denom / numerator
    """
    p = pl.program_id(0)            # phase
    i = pl.program_id(1)            # dst-row block
    nb = pl.num_programs(1)
    row0 = pl.multiple_of(i * tile_n, tile_n)

    @pl.when((p == 0) & (i == 0))
    def _init():
        m_ref[...] = jnp.full_like(m_ref, -1e30)   # finite sentinel: avoids inf-inf NaNs
        l_ref[...] = jnp.zeros_like(l_ref)
        n_ref[...] = jnp.zeros_like(n_ref)
        out_ref[...] = jnp.zeros_like(out_ref)

    # ---------------- Phase 0: SAGEConv1 (+BN1+ReLU) on this row block ----------------
    @pl.when(p == 0)
    def _layer1():
        # Mean aggregation on the MXU (bf16 x; adj is exact 0/1). Degree scale in f32.
        x_bf = x_ref[...].astype(jnp.bfloat16)                                   # [Np,1]
        agg1 = jnp.dot(adj_ref[...], x_bf, preferred_element_type=jnp.float32)   # [T,1]
        agg1 = agg1 * deginv_ref[...]
        x_blk = x_ref[pl.ds(row0, tile_n), :]                                    # [T,1] f32
        h1 = (agg1 * vec_ref[0:1, :]        # folded lin_l row
              + x_blk * vec_ref[1:2, :]     # folded lin_r row
              + vec_ref[2:3, :])            # folded bias + BN shift
        h1_ref[pl.ds(row0, tile_n), :] = jnp.maximum(h1, 0.0)   # ReLU; Dropout = identity

    # -------- Phase 1: SAGEConv2 (+BN2+ReLU) + attention pooling (online softmax) -----
    @pl.when(p == 1)
    def _layer2_pool():
        h1_full = h1_ref[...]                                                    # [Np,H]
        agg2 = jnp.dot(adj_ref[...], h1_full.astype(jnp.bfloat16),
                       preferred_element_type=jnp.float32)                       # [T,H]
        agg2 = agg2 * deginv_ref[...]                                            # mean in f32
        h1_blk = h1_ref[pl.ds(row0, tile_n), :]                                  # [T,H]
        # Two K=H MXU dots into one f32 accumulator (no [T,2H] concat copy).
        h2 = (jnp.dot(agg2.astype(jnp.bfloat16), w2_ref[0:hidden, :],
                      preferred_element_type=jnp.float32)
              + jnp.dot(h1_blk.astype(jnp.bfloat16), w2_ref[hidden:, :],
                        preferred_element_type=jnp.float32)
              + vec_ref[3:4, :])
        h2 = jnp.maximum(h2, 0.0)                                                # [T,H]

        gate_b = scal_ref[0]
        s = jnp.sum(h2 * vec_ref[4:5, :], axis=-1, keepdims=True) + gate_b       # [T,1]
        q = jnp.sum(h2 * vec_ref[5:6, :], axis=-1, keepdims=True)                # [T,1]

        # Graph membership built in-kernel (padded rows have batch=-1 -> all-zero mask).
        gid = jax.lax.broadcasted_iota(jnp.int32, (tile_n, g_pad), 1)
        mask = (batch_ref[...] == gid).astype(jnp.float32)                       # [T,Gp]

        # Online per-graph softmax accumulation (f32 only: the 1e30 constant must stay f32).
        s_m = s - (1.0 - mask) * 1e30                                            # [T,Gp]
        m_blk = jnp.max(s_m, axis=0, keepdims=True)                              # [1,Gp]
        m_new = jnp.maximum(m_ref[...], m_blk)
        alpha = jnp.exp(m_ref[...] - m_new)
        node_m = jnp.sum(mask * m_new, axis=-1, keepdims=True)                   # [T,1]
        e = jnp.exp(s - node_m)                                                  # [T,1]
        l_ref[...] = alpha * l_ref[...] + jnp.sum(e * mask, axis=0, keepdims=True)
        n_ref[...] = alpha * n_ref[...] + jnp.sum((e * q) * mask, axis=0, keepdims=True)
        m_ref[...] = m_new

        @pl.when(i == nb - 1)
        def _finalize():
            lin_b = scal_ref[1]
            den = jnp.maximum(l_ref[...], 1e-30)
            logits = n_ref[...] / den + lin_b        # exact division (EUP slack is free)
            out_ref[...] = jax.nn.sigmoid(logits)


@functools.partial(jax.jit, static_argnames=("num_graphs", "tile_n"))
def kinome_gnn_forward(x, edge_index, batch, params, num_graphs, tile_n=256):
    """Build 0/1 adjacency + deg_inv, fold BN, pack params, call the tiled kernel."""
    n = x.shape[0]
    hidden = params["w2_l"].shape[0]

    # Row-block tiling (tile_n rows of dst per grid step), padded to a multiple of 8.
    tile = max(8, min(_round_up(tile_n, 8), _round_up(n, 8)))
    n_pad = _round_up(max(n, 8), tile)
    nb = n_pad // tile
    g_pad = _round_up(max(num_graphs, 128), 128)     # lane-dense output / accumulators

    # TODO(synk): for very large kinome graphs replace the dense O(N^2) adjacency with
    # CSR neighbor lists + PrefetchScalarGridSpec gathers (O(E)); splitting the two
    # layers into separate pallas_calls would also allow a "parallel" dst-row axis for
    # the v7x megacore.
    src = edge_index[0].astype(jnp.int32)
    dst = edge_index[1].astype(jnp.int32)
    adj = jnp.zeros((n_pad, n_pad), jnp.bfloat16).at[dst, src].add(
        jnp.ones_like(dst, dtype=jnp.bfloat16))                         # raw 0/1 counts, exact in bf16
    deg = jnp.zeros((n_pad,), jnp.float32).at[dst].add(1.0)
    deg_inv = (1.0 / jnp.maximum(deg, 1.0)).reshape(n_pad, 1)           # normalization deferred to kernel

    x_pad = jnp.zeros((n_pad, 1), jnp.float32).at[:n, :].set(
        x.astype(jnp.float32).reshape(n, 1))
    batch_pad = jnp.full((n_pad, 1), -1, jnp.int32).at[:n, 0].set(batch.astype(jnp.int32))

    # Fold eval-mode BatchNorm (running stats) into weights / shift rows.
    eps = 1e-5
    bn1_scale = params["bn1_gamma"] * jax.lax.rsqrt(params["bn1_var"] + eps)
    bn1_shift = params["bn1_beta"] - params["bn1_mean"] * bn1_scale
    bn2_scale = params["bn2_gamma"] * jax.lax.rsqrt(params["bn2_var"] + eps)
    bn2_shift = params["bn2_beta"] - params["bn2_mean"] * bn2_scale

    vec = jnp.zeros((8, hidden), jnp.float32)
    vec = vec.at[0].set(params["w1_l"][0] * bn1_scale)
    vec = vec.at[1].set(params["w1_r"][0] * bn1_scale)
    vec = vec.at[2].set(params["b1"] * bn1_scale + bn1_shift)
    vec = vec.at[3].set(params["b2"] * bn2_scale + bn2_shift)
    vec = vec.at[4].set(params["gate_w"][:, 0])
    vec = vec.at[5].set(params["lin_w"][:, 0])

    w2 = jnp.concatenate([params["w2_l"] * bn2_scale[None, :],
                          params["w2_r"] * bn2_scale[None, :]],
                         axis=0).astype(jnp.bfloat16)                    # [2H, H]
    scalars = jnp.stack([params["gate_b"][0], params["lin_b"][0]]).astype(jnp.float32)

    kernel = functools.partial(kinome_gnn_kernel, tile_n=tile, hidden=hidden, g_pad=g_pad)

    out = pl.pallas_call(
        kernel,
        out_shape=jax.ShapeDtypeStruct((1, g_pad), jnp.float32),
        grid=(2, nb),
        in_specs=[
            pl.BlockSpec((tile, n_pad), lambda p, i: (i, 0)),            # adj row block (pipelined)
            pl.BlockSpec((n_pad, 1), lambda p, i: (0, 0)),               # x, fully resident
            pl.BlockSpec((tile, 1), lambda p, i: (i, 0)),                # deg_inv row block
            pl.BlockSpec((tile, 1), lambda p, i: (i, 0)),                # batch ids row block
            pl.BlockSpec((8, hidden), lambda p, i: (0, 0)),              # packed params
            pl.BlockSpec((2 * hidden, hidden), lambda p, i: (0, 0)),     # fused layer-2 weights
            pl.BlockSpec(memory_space=pltpu.MemorySpace.SMEM),           # (gate_b, lin_b) scalars
        ],
        out_specs=pl.BlockSpec((1, g_pad), lambda p, i: (0, 0)),
        scratch_shapes=[
            pltpu.VMEM((n_pad, hidden), jnp.float32),   # h1 activations (persist across grid)
            pltpu.VMEM((1, g_pad), jnp.float32),        # running per-graph softmax max
            pltpu.VMEM((1, g_pad), jnp.float32),        # running softmax denominator
            pltpu.VMEM((1, g_pad), jnp.float32),        # running softmax numerator
        ],
        compiler_params=pltpu.CompilerParams(
            # Both axes carry state (h1 scratch / pooling accumulators) -> arbitrary.
            dimension_semantics=("arbitrary", "arbitrary"),
            vmem_limit_bytes=32 * 1024 * 1024,
        ),
    )(adj, x_pad, deg_inv, batch_pad, vec, w2, scalars)
    return out[0, :num_graphs]   # [G] == torch .squeeze(1)


def init_params(key, hidden=32, in_dim=1):
    ks = jax.random.split(key, 8)
    f32 = jnp.float32
    return {
        # SAGEConv1 (weights stored [in, out] for right-multiplication)
        "w1_l": 0.2 * jax.random.normal(ks[0], (in_dim, hidden), f32),
        "w1_r": 0.2 * jax.random.normal(ks[1], (in_dim, hidden), f32),
        "b1": 0.1 * jax.random.normal(ks[2], (hidden,), f32),
        # BatchNorm1 (as initialized by PyG BatchNorm)
        "bn1_gamma": jnp.ones((hidden,), f32),
        "bn1_beta": jnp.zeros((hidden,), f32),
        "bn1_mean": jnp.zeros((hidden,), f32),
        "bn1_var": jnp.ones((hidden,), f32),
        # SAGEConv2
        "w2_l": 0.2 * jax.random.normal(ks[3], (hidden, hidden), f32),
        "w2_r": 0.2 * jax.random.normal(ks[4], (hidden, hidden), f32),
        "b2": 0.1 * jax.random.normal(ks[5], (hidden,), f32),
        # BatchNorm2
        "bn2_gamma": jnp.ones((hidden,), f32),
        "bn2_beta": jnp.zeros((hidden,), f32),
        "bn2_mean": jnp.zeros((hidden,), f32),
        "bn2_var": jnp.ones((hidden,), f32),
        # AttentionalAggregation gate: Linear(hidden, 1)
        "gate_w": 0.2 * jax.random.normal(ks[6], (hidden, 1), f32),
        "gate_b": jnp.zeros((1,), f32),
        # Final Linear(hidden, 1)
        "lin_w": 0.2 * jax.random.normal(ks[7], (hidden, 1), f32),
        "lin_b": jnp.zeros((1,), f32),
    }


def _reference(x, edge_index, batch, params, num_graphs):
    """Pure-JAX f32 reference of the PyTorch forward (eval mode)."""
    n = x.shape[0]
    src, dst = edge_index[0], edge_index[1]
    adj = jnp.zeros((n, n), jnp.float32).at[dst, src].add(1.0)
    deg = jnp.maximum(jnp.sum(adj, axis=1, keepdims=True), 1.0)

    def sage(h, wl, wr, b):
        return ((adj @ h) / deg) @ wl + h @ wr + b

    def bn(h, g_, b_, m_, v_):
        return g_ * (h - m_) * jax.lax.rsqrt(v_ + 1e-5) + b_

    h = jax.nn.relu(bn(sage(x, params["w1_l"], params["w1_r"], params["b1"]),
                       params["bn1_gamma"], params["bn1_beta"],
                       params["bn1_mean"], params["bn1_var"]))
    h = jax.nn.relu(bn(sage(h, params["w2_l"], params["w2_r"], params["b2"]),
                       params["bn2_gamma"], params["bn2_beta"],
                       params["bn2_mean"], params["bn2_var"]))
    gate = h @ params["gate_w"] + params["gate_b"]                        # [n,1]
    mask = (batch[:, None] == jnp.arange(num_graphs)[None, :]).astype(jnp.float32)
    gmax = jnp.max(jnp.where(mask > 0, gate, -jnp.inf), axis=0)           # [G]
    e = jnp.exp(gate - gmax[None, :]) * mask                              # [n,G]
    w = e / jnp.maximum(jnp.sum(e, axis=0, keepdims=True), 1e-30)
    pooled = w.T @ h                                                      # [G,H]
    return jax.nn.sigmoid(pooled @ params["lin_w"] + params["lin_b"])[:, 0]


if __name__ == "__main__":
    key = jax.random.PRNGKey(0)
    k_x, k_e, k_p = jax.random.split(key, 3)

    N, E, HIDDEN, G = 16, 32, 32, 2
    x = jax.random.normal(k_x, (N, 1), jnp.float32)                 # node features [N, 1]
    edge_index = jax.random.randint(k_e, (2, E), 0, N, jnp.int32)   # [2, E] (src, dst)
    batch = jnp.concatenate([jnp.zeros(N // 2, jnp.int32),
                             jnp.ones(N - N // 2, jnp.int32)])      # [N] graph ids

    params = init_params(k_p, hidden=HIDDEN, in_dim=1)

    # tile_n=8 -> 2 dst-row blocks: exercises the tiled/pipelined 2-phase path.
    out = kinome_gnn_forward(x, edge_index, batch, params, num_graphs=G, tile_n=8)
    out = jax.block_until_ready(out)

    ref = _reference(x, edge_index, batch, params, G)
    assert out.shape == (G,)
    assert bool(jnp.all(jnp.isfinite(out)))
    assert float(jnp.max(jnp.abs(out - ref))) < 5e-2, (out, ref)
    # TODO(synk): training-mode Dropout / BatchNorm batch-statistics are not modeled
    # (inference-mode forward only).
    print("KERNEL_OK")
</pallas_src>

<mosaic_0001>
module attributes {stable_mosaic.version = 11 : i64} {
  func.func private @main(%arg0: i32) attributes {dimension_semantics = [#tpu.dimension_semantics<core_parallel>], iteration_bounds = array<i64: 2>, tpu.core_type = #tpu.core_type<sc_scalar_subcore>, window_params = []} {
    return
  }
}

module attributes {stable_mosaic.version = 11 : i64} {
  func.func private @main(%arg0: i32) attributes {dimension_semantics = [#tpu.dimension_semantics<core_parallel>], iteration_bounds = array<i64: 2>, tpu.core_type = #tpu.core_type<sc_scalar_subcore>, window_params = []} {
    return
  }
}

module attributes {stable_mosaic.version = 11 : i64} {
  func.func @kinome_gnn_kernel(%arg0: i32, %arg1: i32, %arg2: memref<8x16xbf16, #tpu.memory_space<vmem>>, %arg3: memref<16x1xf32, #tpu.memory_space<vmem>>, %arg4: memref<8x1xf32, #tpu.memory_space<vmem>>, %arg5: memref<8x1xi32, #tpu.memory_space<vmem>>, %arg6: memref<8x32xf32, #tpu.memory_space<vmem>>, %arg7: memref<64x32xbf16, #tpu.memory_space<vmem>>, %arg8: memref<2xf32, #tpu.memory_space<smem>>, %arg9: memref<1x128xf32, #tpu.memory_space<vmem>>, %arg10: memref<16x32xf32, #tpu.memory_space<vmem>>, %arg11: memref<1x128xf32, #tpu.memory_space<vmem>>, %arg12: memref<1x128xf32, #tpu.memory_space<vmem>>, %arg13: memref<1x128xf32, #tpu.memory_space<vmem>>) attributes {dimension_semantics = [#tpu.dimension_semantics<arbitrary>, #tpu.dimension_semantics<arbitrary>], iteration_bounds = array<i64: 2, 2>, scalar_prefetch = 0 : i64, scratch_operands = 4 : i64, tpu.core_type = #tpu.core_type<tc>, window_params = [{transform_indices = @transform_0, window_bounds = array<i64: 8, 16>}, {pipeline_mode = #tpu.pipeline_mode<synchronous>, transform_indices = @transform_1, window_bounds = array<i64: 16, 1>}, {transform_indices = @transform_2, window_bounds = array<i64: 8, 1>}, {transform_indices = @transform_3, window_bounds = array<i64: 8, 1>}, {pipeline_mode = #tpu.pipeline_mode<synchronous>, transform_indices = @transform_4, window_bounds = array<i64: 8, 32>}, {pipeline_mode = #tpu.pipeline_mode<synchronous>, transform_indices = @transform_5, window_bounds = array<i64: 64, 32>}, {transform_indices = @transform_6, window_bounds = array<i64: 2>}, {pipeline_mode = #tpu.pipeline_mode<synchronous>, transform_indices = @transform_7, window_bounds = array<i64: 1, 128>}]} {
    %c8_i32 = arith.constant 8 : i32
    %0 = arith.muli %arg1, %c8_i32 : i32
    %1 = tpu.assume_multiple %0, 8 : i32
    %c0_i32 = arith.constant 0 : i32
    %2 = arith.cmpi eq, %arg0, %c0_i32 : i32
    %c0_i32_0 = arith.constant 0 : i32
    %3 = arith.cmpi eq, %arg1, %c0_i32_0 : i32
    %4 = arith.andi %2, %3 : i1
    %5 = arith.extui %4 : i1 to i32
    %c0_i32_1 = arith.constant 0 : i32
    %6 = arith.cmpi ne, %5, %c0_i32_1 : i32
    scf.if %6 {
      %cst = arith.constant -1.000000e+30 : f32
      %13 = vector.broadcast %cst : f32 to vector<1x128xf32>
      %c0 = arith.constant 0 : index
      %c0_5 = arith.constant 0 : index
      %14 = vector.load %arg11[%c0, %c0_5] : memref<1x128xf32, #tpu.memory_space<vmem>>, vector<1x128xf32>
      tpu.vector_store %arg11[%c0, %c0_5], %13 {strides = array<i32>} : memref<1x128xf32, #tpu.memory_space<vmem>>, vector<1x128xf32>,
      %cst_6 = arith.constant 0.000000e+00 : f32
      %15 = vector.broadcast %cst_6 : f32 to vector<1x128xf32>
      %c0_7 = arith.constant 0 : index
      %c0_8 = arith.constant 0 : index
      %16 = vector.load %arg12[%c0_7, %c0_8] : memref<1x128xf32, #tpu.memory_space<vmem>>, vector<1x128xf32>
      tpu.vector_store %arg12[%c0_7, %c0_8], %15 {strides = array<i32>} : memref<1x128xf32, #tpu.memory_space<vmem>>, vector<1x128xf32>,
      %cst_9 = arith.constant 0.000000e+00 : f32
      %17 = vector.broadcast %cst_9 : f32 to vector<1x128xf32>
      %c0_10 = arith.constant 0 : index
      %c0_11 = arith.constant 0 : index
      %18 = vector.load %arg13[%c0_10, %c0_11] : memref<1x128xf32, #tpu.memory_space<vmem>>, vector<1x128xf32>
      tpu.vector_store %arg13[%c0_10, %c0_11], %17 {strides = array<i32>} : memref<1x128xf32, #tpu.memory_space<vmem>>, vector<1x128xf32>,
      %cst_12 = arith.constant 0.000000e+00 : f32
      %19 = vector.broadcast %cst_12 : f32 to vector<1x128xf32>
      %c0_13 = arith.constant 0 : index
      %c0_14 = arith.constant 0 : index
      %20 = vector.load %arg9[%c0_13, %c0_14] : memref<1x128xf32, #tpu.memory_space<vmem>>, vector<1x128xf32>
      tpu.vector_store %arg9[%c0_13, %c0_14], %19 {strides = array<i32>} : memref<1x128xf32, #tpu.memory_space<vmem>>, vector<1x128xf32>,
    } else {
    }
    %c0_i32_2 = arith.constant 0 : i32
    %7 = arith.cmpi eq, %arg0, %c0_i32_2 : i32
    %8 = arith.extui %7 : i1 to i32
    %c0_i32_3 = arith.constant 0 : i32
    %9 = arith.cmpi ne, %8, %c0_i32_3 : i32
    scf.if %9 {
      %c0 = arith.constant 0 : index
      %c0_5 = arith.constant 0 : index
      %13 = vector.load %arg3[%c0, %c0_5] : memref<16x1xf32, #tpu.memory_space<vmem>>, vector<16x1xf32>
      %14 = arith.truncf %13 : vector<16x1xf32> to vector<16x1xbf16>
      %c0_6 = arith.constant 0 : index
      %c0_7 = arith.constant 0 : index
      %15 = vector.load %arg2[%c0_6, %c0_7] : memref<8x16xbf16, #tpu.memory_space<vmem>>, vector<8x16xbf16>
      %cst = arith.constant dense<0.000000e+00> : vector<8x1xf32>
      %16 = tpu.matmul %15, %14, %cst {dimension_numbers = #tpu.dot_dimension_numbers<[1], [0], [0], [1], [0, 0, 1, 1], [], []>} : vector<8x16xbf16>, vector<16x1xbf16>, vector<8x1xf32> -> vector<8x1xf32>
      %c0_8 = arith.constant 0 : index
      %c0_9 = arith.constant 0 : index
      %17 = vector.load %arg4[%c0_8, %c0_9] : memref<8x1xf32, #tpu.memory_space<vmem>>, vector<8x1xf32>
      %18 = arith.mulf %16, %17 : vector<8x1xf32>
      %19 = arith.index_cast %1 : i32 to index
      %c0_10 = arith.constant 0 : index
      %20 = vector.load %arg3[%19, %c0_10] : memref<16x1xf32, #tpu.memory_space<vmem>>, vector<8x1xf32>
      %c0_11 = arith.constant 0 : index
      %c0_12 = arith.constant 0 : index
      %21 = vector.load %arg6[%c0_11, %c0_12] : memref<8x32xf32, #tpu.memory_space<vmem>>, vector<1x32xf32>
      %22 = vector.broadcast %18 : vector<8x1xf32> to vector<8x32xf32>
      %23 = vector.broadcast %21 : vector<1x32xf32> to vector<8x32xf32>
      %24 = arith.mulf %22, %23 : vector<8x32xf32>
      %c1 = arith.constant 1 : index
      %c0_13 = arith.constant 0 : index
      %25 = vector.load %arg6[%c1, %c0_13] : memref<8x32xf32, #tpu.memory_space<vmem>>, vector<1x32xf32>
      %26 = vector.broadcast %20 : vector<8x1xf32> to vector<8x32xf32>
      %27 = vector.broadcast %25 : vector<1x32xf32> to vector<8x32xf32>
      %28 = arith.mulf %26, %27 : vector<8x32xf32>
      %29 = arith.addf %24, %28 : vector<8x32xf32>
      %c2 = arith.constant 2 : index
      %c0_14 = arith.constant 0 : index
      %30 = vector.load %arg6[%c2, %c0_14] : memref<8x32xf32, #tpu.memory_space<vmem>>, vector<1x32xf32>
      %31 = vector.broadcast %30 : vector<1x32xf32> to vector<8x32xf32>
      %32 = arith.addf %29, %31 : vector<8x32xf32>
      %cst_15 = arith.constant 0.000000e+00 : f32
      %33 = vector.broadcast %cst_15 : f32 to vector<8x32xf32>
      %34 = arith.maximumf %32, %33 : vector<8x32xf32>
      %35 = arith.index_cast %1 : i32 to index
      %c0_16 = arith.constant 0 : index
      %36 = vector.load %arg10[%35, %c0_16] : memref<16x32xf32, #tpu.memory_space<vmem>>, vector<8x32xf32>
      tpu.vector_store %arg10[%35, %c0_16], %34 {strides = array<i32>} : memref<16x32xf32, #tpu.memory_space<vmem>>, vector<8x32xf32>,
    } else {
    }
    %c1_i32 = arith.constant 1 : i32
    %10 = arith.cmpi eq, %arg0, %c1_i32 : i32
    %11 = arith.extui %10 : i1 to i32
    %c0_i32_4 = arith.constant 0 : i32
    %12 = arith.cmpi ne, %11, %c0_i32_4 : i32
    scf.if %12 {
      %c0 = arith.constant 0 : index
      %c0_5 = arith.constant 0 : index
      %13 = vector.load %arg10[%c0, %c0_5] : memref<16x32xf32, #tpu.memory_space<vmem>>, vector<16x32xf32>
      %c0_6 = arith.constant 0 : index
      %c0_7 = arith.constant 0 : index
      %14 = vector.load %arg2[%c0_6, %c0_7] : memref<8x16xbf16, #tpu.memory_space<vmem>>, vector<8x16xbf16>
      %15 = arith.truncf %13 : vector<16x32xf32> to vector<16x32xbf16>
      %cst = arith.constant dense<0.000000e+00> : vector<8x32xf32>
      %16 = tpu.matmul %14, %15, %cst {dimension_numbers = #tpu.dot_dimension_numbers<[1], [0], [0], [1], [0, 0, 1, 1], [], []>} : vector<8x16xbf16>, vector<16x32xbf16>, vector<8x32xf32> -> vector<8x32xf32>
      %c0_8 = arith.constant 0 : index
      %c0_9 = arith.constant 0 : index
      %17 = vector.load %arg4[%c0_8, %c0_9] : memref<8x1xf32, #tpu.memory_space<vmem>>, vector<8x1xf32>
      %18 = vector.broadcast %17 : vector<8x1xf32> to vector<8x32xf32>
      %19 = arith.mulf %16, %18 : vector<8x32xf32>
      %20 = arith.index_cast %1 : i32 to index
      %c0_10 = arith.constant 0 : index
      %21 = vector.load %arg10[%20, %c0_10] : memref<16x32xf32, #tpu.memory_space<vmem>>, vector<8x32xf32>
      %22 = arith.truncf %19 : vector<8x32xf32> to vector<8x32xbf16>
      %c0_11 = arith.constant 0 : index
      %c0_12 = arith.constant 0 : index
      %23 = vector.load %arg7[%c0_11, %c0_12] : memref<64x32xbf16, #tpu.memory_space<vmem>>, vector<32x32xbf16>
      %cst_13 = arith.constant dense<0.000000e+00> : vector<8x32xf32>
      %24 = tpu.matmul %22, %23, %cst_13 {dimension_numbers = #tpu.dot_dimension_numbers<[1], [0], [0], [1], [0, 0, 1, 1], [], []>} : vector<8x32xbf16>, vector<32x32xbf16>, vector<8x32xf32> -> vector<8x32xf32>
      %25 = arith.truncf %21 : vector<8x32xf32> to vector<8x32xbf16>
      %c32 = arith.constant 32 : index
      %c0_14 = arith.constant 0 : index
      %26 = vector.load %arg7[%c32, %c0_14] : memref<64x32xbf16, #tpu.memory_space<vmem>>, vector<32x32xbf16>
      %cst_15 = arith.constant dense<0.000000e+00> : vector<8x32xf32>
      %27 = tpu.matmul %25, %26, %cst_15 {dimension_numbers = #tpu.dot_dimension_numbers<[1], [0], [0], [1], [0, 0, 1, 1], [], []>} : vector<8x32xbf16>, vector<32x32xbf16>, vector<8x32xf32> -> vector<8x32xf32>
      %28 = arith.addf %24, %27 : vector<8x32xf32>
      %c3 = arith.constant 3 : index
      %c0_16 = arith.constant 0 : index
      %29 = vector.load %arg6[%c3, %c0_16] : memref<8x32xf32, #tpu.memory_space<vmem>>, vector<1x32xf32>
      %30 = vector.broadcast %29 : vector<1x32xf32> to vector<8x32xf32>
      %31 = arith.addf %28, %30 : vector<8x32xf32>
      %cst_17 = arith.constant 0.000000e+00 : f32
      %32 = vector.broadcast %cst_17 : f32 to vector<8x32xf32>
      %33 = arith.maximumf %31, %32 : vector<8x32xf32>
      %c0_18 = arith.constant 0 : index
      %34 = memref.load %arg8[%c0_18] : memref<2xf32, #tpu.memory_space<smem>>
      %c4 = arith.constant 4 : index
      %c0_19 = arith.constant 0 : index
      %35 = vector.load %arg6[%c4, %c0_19] : memref<8x32xf32, #tpu.memory_space<vmem>>, vector<1x32xf32>
      %36 = vector.broadcast %35 : vector<1x32xf32> to vector<8x32xf32>
      %37 = arith.mulf %33, %36 : vector<8x32xf32>
      %cst_20 = arith.constant dense<0.000000e+00> : vector<8xf32>
      %38 = vector.multi_reduction <add>, %37, %cst_20 [1] : vector<8x32xf32> to vector<8xf32>
      %39 = vector.shape_cast %38 : vector<8xf32> to vector<8x1xf32>
      %40 = vector.broadcast %34 : f32 to vector<8x1xf32>
      %41 = arith.addf %39, %40 : vector<8x1xf32>
      %c5 = arith.constant 5 : index
      %c0_21 = arith.constant 0 : index
      %42 = vector.load %arg6[%c5, %c0_21] : memref<8x32xf32, #tpu.memory_space<vmem>>, vector<1x32xf32>
      %43 = vector.broadcast %42 : vector<1x32xf32> to vector<8x32xf32>
      %44 = arith.mulf %33, %43 : vector<8x32xf32>
      %cst_22 = arith.constant dense<0.000000e+00> : vector<8xf32>
      %45 = vector.multi_reduction <add>, %44, %cst_22 [1] : vector<8x32xf32> to vector<8xf32>
      %46 = vector.shape_cast %45 : vector<8xf32> to vector<8x1xf32>
      %47 = tpu.iota {dimensions = array<i32: 1>} : vector<8x128xi32>
      %c0_23 = arith.constant 0 : index
      %c0_24 = arith.constant 0 : index
      %48 = vector.load %arg5[%c0_23, %c0_24] : memref<8x1xi32, #tpu.memory_space<vmem>>, vector<8x1xi32>
      %49 = vector.broadcast %48 : vector<8x1xi32> to vector<8x128xi32>
      %50 = arith.cmpi eq, %49, %47 : vector<8x128xi32>
      %51 = arith.extui %50 : vector<8x128xi1> to vector<8x128xi32>
      %52 = arith.sitofp %51 : vector<8x128xi32> to vector<8x128xf32>
      %cst_25 = arith.constant 1.000000e+00 : f32
      %53 = vector.broadcast %cst_25 : f32 to vector<8x128xf32>
      %54 = arith.subf %53, %52 : vector<8x128xf32>
      %cst_26 = arith.constant 1.000000e+30 : f32
      %55 = vector.broadcast %cst_26 : f32 to vector<8x128xf32>
      %56 = arith.mulf %54, %55 : vector<8x128xf32>
      %57 = vector.broadcast %41 : vector<8x1xf32> to vector<8x128xf32>
      %58 = arith.subf %57, %56 : vector<8x128xf32>
      %cst_27 = arith.constant dense<0xFF800000> : vector<128xf32>
      %59 = vector.multi_reduction <maximumf>, %58, %cst_27 [0] : vector<8x128xf32> to vector<128xf32>
      %60 = vector.shape_cast %59 : vector<128xf32> to vector<1x128xf32>
      %c0_28 = arith.constant 0 : index
      %c0_29 = arith.constant 0 : index
      %61 = vector.load %arg11[%c0_28, %c0_29] : memref<1x128xf32, #tpu.memory_space<vmem>>, vector<1x128xf32>
      %62 = arith.maximumf %61, %60 : vector<1x128xf32>
      %c0_30 = arith.constant 0 : index
      %c0_31 = arith.constant 0 : index
      %63 = vector.load %arg11[%c0_30, %c0_31] : memref<1x128xf32, #tpu.memory_space<vmem>>, vector<1x128xf32>
      %64 = arith.subf %63, %62 : vector<1x128xf32>
      %65 = math.exp %64 : vector<1x128xf32>
      %66 = vector.broadcast %62 : vector<1x128xf32> to vector<8x128xf32>
      %67 = arith.mulf %52, %66 : vector<8x128xf32>
      %cst_32 = arith.constant dense<0.000000e+00> : vector<8xf32>
      %68 = vector.multi_reduction <add>, %67, %cst_32 [1] : vector<8x128xf32> to vector<8xf32>
      %69 = vector.shape_cast %68 : vector<8xf32> to vector<8x1xf32>
      %70 = arith.subf %41, %69 : vector<8x1xf32>
      %71 = math.exp %70 : vector<8x1xf32>
      %c0_33 = arith.constant 0 : index
      %c0_34 = arith.constant 0 : index
      %72 = vector.load %arg12[%c0_33, %c0_34] : memref<1x128xf32, #tpu.memory_space<vmem>>, vector<1x128xf32>
      %73 = arith.mulf %65, %72 : vector<1x128xf32>
      %74 = vector.broadcast %71 : vector<8x1xf32> to vector<8x128xf32>
      %75 = arith.mulf %74, %52 : vector<8x128xf32>
      %cst_35 = arith.constant dense<0.000000e+00> : vector<128xf32>
      %76 = vector.multi_reduction <add>, %75, %cst_35 [0] : vector<8x128xf32> to vector<128xf32>
      %77 = vector.shape_cast %76 : vector<128xf32> to vector<1x128xf32>
      %78 = arith.addf %73, %77 : vector<1x128xf32>
      %c0_36 = arith.constant 0 : index
      %c0_37 = arith.constant 0 : index
      %79 = vector.load %arg12[%c0_36, %c0_37] : memref<1x128xf32, #tpu.memory_space<vmem>>, vector<1x128xf32>
      tpu.vector_store %arg12[%c0_36, %c0_37], %78 {strides = array<i32>} : memref<1x128xf32, #tpu.memory_space<vmem>>, vector<1x128xf32>,
      %c0_38 = arith.constant 0 : index
      %c0_39 = arith.constant 0 : index
      %80 = vector.load %arg13[%c0_38, %c0_39] : memref<1x128xf32, #tpu.memory_space<vmem>>, vector<1x128xf32>
      %81 = arith.mulf %65, %80 : vector<1x128xf32>
      %82 = arith.mulf %71, %46 : vector<8x1xf32>
      %83 = vector.broadcast %82 : vector<8x1xf32> to vector<8x128xf32>
      %84 = arith.mulf %83, %52 : vector<8x128xf32>
      %cst_40 = arith.constant dense<0.000000e+00> : vector<128xf32>
      %85 = vector.multi_reduction <add>, %84, %cst_40 [0] : vector<8x128xf32> to vector<128xf32>
      %86 = vector.shape_cast %85 : vector<128xf32> to vector<1x128xf32>
      %87 = arith.addf %81, %86 : vector<1x128xf32>
      %c0_41 = arith.constant 0 : index
      %c0_42 = arith.constant 0 : index
      %88 = vector.load %arg13[%c0_41, %c0_42] : memref<1x128xf32, #tpu.memory_space<vmem>>, vector<1x128xf32>
      tpu.vector_store %arg13[%c0_41, %c0_42], %87 {strides = array<i32>} : memref<1x128xf32, #tpu.memory_space<vmem>>, vector<1x128xf32>,
      %c0_43 = arith.constant 0 : index
      %c0_44 = arith.constant 0 : index
      %89 = vector.load %arg11[%c0_43, %c0_44] : memref<1x128xf32, #tpu.memory_space<vmem>>, vector<1x128xf32>
      tpu.vector_store %arg11[%c0_43, %c0_44], %62 {strides = array<i32>} : memref<1x128xf32, #tpu.memory_space<vmem>>, vector<1x128xf32>,
      %c1_i32_45 = arith.constant 1 : i32
      %90 = arith.cmpi eq, %arg1, %c1_i32_45 : i32
      %91 = arith.extui %90 : i1 to i32
      %c0_i32_46 = arith.constant 0 : i32
      %92 = arith.cmpi ne, %91, %c0_i32_46 : i32
      scf.if %92 {
        %c1 = arith.constant 1 : index
        %93 = memref.load %arg8[%c1] : memref<2xf32, #tpu.memory_space<smem>>
        %c0_47 = arith.constant 0 : index
        %c0_48 = arith.constant 0 : index
        %94 = vector.load %arg12[%c0_47, %c0_48] : memref<1x128xf32, #tpu.memory_space<vmem>>, vector<1x128xf32>
        %cst_49 = arith.constant 1.000000e-30 : f32
        %95 = vector.broadcast %cst_49 : f32 to vector<1x128xf32>
        %96 = arith.maximumf %94, %95 : vector<1x128xf32>
        %c0_50 = arith.constant 0 : index
        %c0_51 = arith.constant 0 : index
        %97 = vector.load %arg13[%c0_50, %c0_51] : memref<1x128xf32, #tpu.memory_space<vmem>>, vector<1x128xf32>
        %98 = arith.divf %97, %96 : vector<1x128xf32>
        %99 = vector.broadcast %93 : f32 to vector<1x128xf32>
        %100 = arith.addf %98, %99 : vector<1x128xf32>
        %101 = arith.negf %100 : vector<1x128xf32>
        %102 = math.exp %101 : vector<1x128xf32>
        %cst_52 = arith.constant 1.000000e+00 : f32
        %103 = vector.broadcast %cst_52 : f32 to vector<1x128xf32>
        %104 = arith.addf %103, %102 : vector<1x128xf32>
        %105 = arith.divf %103, %104 : vector<1x128xf32>
        %c0_53 = arith.constant 0 : index
        %c0_54 = arith.constant 0 : index
        %106 = vector.load %arg9[%c0_53, %c0_54] : memref<1x128xf32, #tpu.memory_space<vmem>>, vector<1x128xf32>
        tpu.vector_store %arg9[%c0_53, %c0_54], %105 {strides = array<i32>} : memref<1x128xf32, #tpu.memory_space<vmem>>, vector<1x128xf32>,
      } else {
      }
    } else {
    }
    return
  }
  func.func @transform_0(%arg0: i32, %arg1: i32) -> (i32, i32) {
    %c0_i32 = arith.constant 0 : i32
    %c0_i32_0 = arith.constant 0 : i32
    return %arg1, %c0_i32 : i32, i32
  }
  func.func @transform_1(%arg0: i32, %arg1: i32) -> (i32, i32) {
    %c0_i32 = arith.constant 0 : i32
    %c0_i32_0 = arith.constant 0 : i32
    %c0_i32_1 = arith.constant 0 : i32
    return %c0_i32, %c0_i32_0 : i32, i32
  }
  func.func @transform_2(%arg0: i32, %arg1: i32) -> (i32, i32) {
    %c0_i32 = arith.constant 0 : i32
    %c0_i32_0 = arith.constant 0 : i32
    return %arg1, %c0_i32 : i32, i32
  }
  func.func @transform_3(%arg0: i32, %arg1: i32) -> (i32, i32) {
    %c0_i32 = arith.constant 0 : i32
    %c0_i32_0 = arith.constant 0 : i32
    return %arg1, %c0_i32 : i32, i32
  }
  func.func @transform_4(%arg0: i32, %arg1: i32) -> (i32, i32) {
    %c0_i32 = arith.constant 0 : i32
    %c0_i32_0 = arith.constant 0 : i32
    %c0_i32_1 = arith.constant 0 : i32
    return %c0_i32, %c0_i32_0 : i32, i32
  }
  func.func @transform_5(%arg0: i32, %arg1: i32) -> (i32, i32) {
    %c0_i32 = arith.constant 0 : i32
    %c0_i32_0 = arith.constant 0 : i32
    %c0_i32_1 = arith.constant 0 : i32
    return %c0_i32, %c0_i32_0 : i32, i32
  }
  func.func @transform_6(%arg0: i32, %arg1: i32) -> i32 {
    %c0_i32 = arith.constant 0 : i32
    %c0_i32_0 = arith.constant 0 : i32
    return %c0_i32 : i32
  }
  func.func @transform_7(%arg0: i32, %arg1: i32) -> (i32, i32) {
    %c0_i32 = arith.constant 0 : i32
    %c0_i32_0 = arith.constant 0 : i32
    %c0_i32_1 = arith.constant 0 : i32
    return %c0_i32, %c0_i32_0 : i32, i32
  }
}

</mosaic_0001>

<llo_original>
// kernel: kinome_gnn_forward.1
$region0: #{kinome_gnn_forward.1}
  #allocation0 [shape = 'u32[]', space=smem, size = 0x4, offset = 0x4, fixed_abs, tag = 'smem constant byte address 0x4 - core index']
  #allocation1 [shape = 'u32[144,128]{1,0:T(1,128)}', space=vmem, size = 0x12000, scoped, tag = 'internal scratch']
  #allocation2 [shape = 'f32[16,32]{1,0:T(8,128)}', space=vmem, size = 0x2000, scoped, tag = 'scratch operand']
  #allocation3 [shape = 'f32[1,128]{1,0:T(1,128)}', space=vmem, size = 0x200, scoped, tag = 'scratch operand']
  #allocation4 [shape = 'f32[1,128]{1,0:T(1,128)}', space=vmem, size = 0x200, scoped, tag = 'scratch operand']
  #allocation5 [shape = 'f32[1,128]{1,0:T(1,128)}', space=vmem, size = 0x200, scoped, tag = 'scratch operand']
  %s0 = inlined_call_operand.vmem [shape: bf16[16,16], index: 0, kind: input, shape index: {}]
  %s1 = inlined_call_operand.vmem [shape: f32[16,1], index: 1, kind: input, shape index: {}]
  %s2 = inlined_call_operand.vmem [shape: f32[16,1], index: 2, kind: input, shape index: {}]
  %s3 = inlined_call_operand.vmem [shape: s32[16,1], index: 3, kind: input, shape index: {}]
  %s4 = inlined_call_operand.vmem [shape: f32[8,32], index: 4, kind: input, shape index: {}]
  %s5 = inlined_call_operand.vmem [shape: bf16[64,32], index: 5, kind: input, shape index: {}]
  %s6 = inlined_call_operand.vmem [shape: f32[2], index: 6, kind: input, shape index: {}]
  %s7 = inlined_call_operand.vmem [shape: f32[1,128], index: 7, kind: output, shape index: {}]
  %s8 = sld [smem:[#allocation0]]
  $region81: #{kinome_gnn_forward.1} parent=0
    _
  %s10 = ssub.s32 1, %s8
  %s11 = scalar_select 0, %s10, %s8
  $region1: #{kinome_gnn_forward.1} parent=0
    #allocation6 [shape = 'u8[512]{0}', space=smem, size = 0x200, scoped, tag = 'input window, operand 6, single buffered']
    #allocation7 [shape = 's32[2]{0}', space=sflag, size = 0x8, scoped, tag = 'scoped memory for kinome_gnn_forward.1']
    %12 = vsyncpa [#allocation7], 0
    loop: start=0, step=1, limit=6
    $region2: #{kinome_gnn_forward.1} parent=1 // loop_pre_header
      _
    $region3: #{kinome_gnn_forward.1} parent=1 // loop_header
      %s14 = sphi 0, %s18
      %p15 = scmp.ge.s32.totalorder %s14, 6
      %s21 = sphi 0, %s33
      %s22 = sphi 0, %s29
      %s23 = sphi 0, %s21
      %s24 = sphi 0, %s22
      %s25 = sphi 0, %s23
      %s26 = sphi 0, %s24
      %s36 = sphi 0, %s38
      %s39 = sphi 0, %s36
      %s40 = sphi 0, %s39
      %s56 = sphi 0, %s40
      %s60 = sphi 0, %s60
      %s62 = sphi 0, %s60
      %s63 = sphi 0, %s62
      %s77 = sphi 0, %s63
      %s83 = sphi 0, %s85
      %s86 = sphi 0, %s83
      %s87 = sphi 0, %s86
      %s103 = sphi 0, %s87
      %s109 = sphi 0, %s111
      %s112 = sphi 0, %s109
      %s113 = sphi 0, %s112
      %s129 = sphi 0, %s113
      %s133 = sphi 0, %s133
      %s135 = sphi 0, %s133
      %s136 = sphi 0, %s135
      %s150 = sphi 0, %s136
      %s154 = sphi 0, %s154
      %s156 = sphi 0, %s154
      %s157 = sphi 0, %s156
      %s171 = sphi 0, %s157
      %s175 = sphi 0, %s175
      %s177 = sphi 0, %s175
      %s178 = sphi 0, %s177
      %s192 = sphi 0, %s178
      %s196 = sphi 0, %s196
      %s198 = sphi 0, %s196
      %s199 = sphi 0, %s198
      %s213 = sphi 0, %s199
    $region4: #{kinome_gnn_forward.1} parent=1 // loop_header_branch
      %17 = sbr.rel (%p15) target = $region8
    $region5: #{kinome_gnn_forward.1} parent=1 // loop_body
      %s19 = ssub.s32 %s14, 1
      %s20 = ssub.s32 %s14, 2
      %s27 = sadd.s32 1, %s22
      %p28 = scmp.ge.s32.totalorder %s27, 2
      %s29 = scalar_select %p28, 0, %s27
      %s30 = sadd.s32 1, %s21
      %s31 = scalar_select %p28, %s30, %s21
      %p32 = scmp.ge.s32.totalorder %s31, 2
      %s33 = scalar_select %p32, 0, %s31
      %s34 = ssub.s32 %s22, %s29
      %p35 = scmp.eq.s32.totalorder %s34, 0
      %s37 = sadd.s32 %s36, 1
      %s38 = scalar_select %p35, %s36, %s37
      %p41 = pneg %p35
      %p42 = scmp.eq.s32.totalorder %s14, 3
      %p43 = por %p41, %p42
      %p44 = scmp.ne.s32.totalorder %s36, %s39
      %p45 = scmp.eq.s32.totalorder %s14, 0
      %p46 = por %p44, %p45
      %p47 = scmp.ne.s32.totalorder %s36, %s39
      %p48 = scmp.eq.s32.totalorder %s19, 3
      %p49 = por %p47, %p48
      %p50 = scmp.ne.s32.totalorder %s39, %s40
      %p51 = scmp.eq.s32.totalorder %s19, 0
      %p52 = por %p50, %p51
      %p53 = scmp.ne.s32.totalorder %s39, %s40
      %p54 = scmp.eq.s32.totalorder %s20, 3
      %p55 = por %p53, %p54
      %p57 = scmp.ne.s32.totalorder %s40, %s56
      %p58 = scmp.eq.s32.totalorder %s20, 0
      %p59 = por %p57, %p58
      %s61 = sadd.s32 %s60, 1
      %p64 = scmp.eq.s32.totalorder %s14, 3
      %p65 = scmp.ne.s32.totalorder %s60, %s62
      %p66 = scmp.eq.s32.totalorder %s14, 0
      %p67 = por %p65, %p66
      %p68 = scmp.ne.s32.totalorder %s60, %s62
      %p69 = scmp.eq.s32.totalorder %s19, 3
      %p70 = por %p68, %p69
      %p71 = scmp.ne.s32.totalorder %s62, %s63
      %p72 = scmp.eq.s32.totalorder %s19, 0
      %p73 = por %p71, %p72
      %p74 = scmp.ne.s32.totalorder %s62, %s63
      %p75 = scmp.eq.s32.totalorder %s20, 3
      %p76 = por %p74, %p75
      %p78 = scmp.ne.s32.totalorder %s63, %s77
      %p79 = scmp.eq.s32.totalorder %s20, 0
      %p80 = por %p78, %p79
      %s81 = ssub.s32 %s22, %s29
      %p82 = scmp.eq.s32.totalorder %s81, 0
      %s84 = sadd.s32 %s83, 1
      %s85 = scalar_select %p82, %s83, %s84
      %p88 = pneg %p82
      %p89 = scmp.eq.s32.totalorder %s14, 3
      %p90 = por %p88, %p89
      %p91 = scmp.ne.s32.totalorder %s83, %s86
      %p92 = scmp.eq.s32.totalorder %s14, 0
      %p93 = por %p91, %p92
      %p94 = scmp.ne.s32.totalorder %s83, %s86
      %p95 = scmp.eq.s32.totalorder %s19, 3
      %p96 = por %p94, %p95
      %p97 = scmp.ne.s32.totalorder %s86, %s87
      %p98 = scmp.eq.s32.totalorder %s19, 0
      %p99 = por %p97, %p98
      %p100 = scmp.ne.s32.totalorder %s86, %s87
      %p101 = scmp.eq.s32.totalorder %s20, 3
      %p102 = por %p100, %p101
      %p104 = scmp.ne.s32.totalorder %s87, %s103
      %p105 = scmp.eq.s32.totalorder %s20, 0
      %p106 = por %p104, %p105
      %s107 = ssub.s32 %s22, %s29
      %p108 = scmp.eq.s32.totalorder %s107, 0
      %s110 = sadd.s32 %s109, 1
      %s111 = scalar_select %p108, %s109, %s110
      %p114 = pneg %p108
      %p115 = scmp.eq.s32.totalorder %s14, 3
      %p116 = por %p114, %p115
      %p117 = scmp.ne.s32.totalorder %s109, %s112
      %p118 = scmp.eq.s32.totalorder %s14, 0
      %p119 = por %p117, %p118
      %p120 = scmp.ne.s32.totalorder %s109, %s112
      %p121 = scmp.eq.s32.totalorder %s19, 3
      %p122 = por %p120, %p121
      %p123 = scmp.ne.s32.totalorder %s112, %s113
      %p124 = scmp.eq.s32.totalorder %s19, 0
      %p125 = por %p123, %p124
      %p126 = scmp.ne.s32.totalorder %s112, %s113
      %p127 = scmp.eq.s32.totalorder %s20, 3
      %p128 = por %p126, %p127
      %p130 = scmp.ne.s32.totalorder %s113, %s129
      %p131 = scmp.eq.s32.totalorder %s20, 0
      %p132 = por %p130, %p131
      %s134 = sadd.s32 %s133, 1
      %p137 = scmp.eq.s32.totalorder %s14, 3
      %p138 = scmp.ne.s32.totalorder %s133, %s135
      %p139 = scmp.eq.s32.totalorder %s14, 0
      %p140 = por %p138, %p139
      %p141 = scmp.ne.s32.totalorder %s133, %s135
      %p142 = scmp.eq.s32.totalorder %s19, 3
      %p143 = por %p141, %p142
      %p144 = scmp.ne.s32.totalorder %s135, %s136
      %p145 = scmp.eq.s32.totalorder %s19, 0
      %p146 = por %p144, %p145
      %p147 = scmp.ne.s32.totalorder %s135, %s136
      %p148 = scmp.eq.s32.totalorder %s20, 3
      %p149 = por %p147, %p148
      %p151 = scmp.ne.s32.totalorder %s136, %s150
      %p152 = scmp.eq.s32.totalorder %s20, 0
      %p153 = por %p151, %p152
      %s155 = sadd.s32 %s154, 1
      %p158 = scmp.eq.s32.totalorder %s14, 3
      %p159 = scmp.ne.s32.totalorder %s154, %s156
      %p160 = scmp.eq.s32.totalorder %s14, 0
      %p161 = por %p159, %p160
      %p162 = scmp.ne.s32.totalorder %s154, %s156
      %p163 = scmp.eq.s32.totalorder %s19, 3
      %p164 = por %p162, %p163
      %p165 = scmp.ne.s32.totalorder %s156, %s157
      %p166 = scmp.eq.s32.totalorder %s19, 0
      %p167 = por %p165, %p166
      %p168 = scmp.ne.s32.totalorder %s156, %s157
      %p169 = scmp.eq.s32.totalorder %s20, 3
      %p170 = por %p168, %p169
      %p172 = scmp.ne.s32.totalorder %s157, %s171
      %p173 = scmp.eq.s32.totalorder %s20, 0
      %p174 = por %p172, %p173
      %s176 = sadd.s32 %s175, 1
      %p179 = scmp.eq.s32.totalorder %s14, 3
      %p180 = scmp.ne.s32.totalorder %s175, %s177
      %p181 = scmp.eq.s32.totalorder %s14, 0
      %p182 = por %p180, %p181
      %p183 = scmp.ne.s32.totalorder %s175, %s177
      %p184 = scmp.eq.s32.totalorder %s19, 3
      %p185 = por %p183, %p184
      %p186 = scmp.ne.s32.totalorder %s177, %s178
      %p187 = scmp.eq.s32.totalorder %s19, 0
      %p188 = por %p186, %p187
      %p189 = scmp.ne.s32.totalorder %s177, %s178
      %p190 = scmp.eq.s32.totalorder %s20, 3
      %p191 = por %p189, %p190
      %p193 = scmp.ne.s32.totalorder %s178, %s192
      %p194 = scmp.eq.s32.totalorder %s20, 0
      %p195 = por %p193, %p194
      %s197 = sadd.s32 %s196, 1
      %p200 = scmp.eq.s32.totalorder %s14, 3
      %p201 = scmp.ne.s32.totalorder %s196, %s198
      %p202 = scmp.eq.s32.totalorder %s14, 0
      %p203 = por %p201, %p202
      %p204 = scmp.ne.s32.totalorder %s196, %s198
      %p205 = scmp.eq.s32.totalorder %s19, 3
      %p206 = por %p204, %p205
      %p207 = scmp.ne.s32.totalorder %s198, %s199
      %p208 = scmp.eq.s32.totalorder %s19, 0
      %p209 = por %p207, %p208
      %p210 = scmp.ne.s32.totalorder %s198, %s199
      %p211 = scmp.eq.s32.totalorder %s20, 3
      %p212 = por %p210, %p211
      %p214 = scmp.ne.s32.totalorder %s199, %s213
      %p215 = scmp.eq.s32.totalorder %s20, 0
      %p216 = por %p214, %p215
      %p217 = scmp.le.s32.totalorder 1, %s14
      %p218 = scmp.lt.s32.totalorder %s14, 5
      %p219 = pnand %p217, %p218
      %p220 = pneg %p219
      // Predicated region
      $region9: #{kinome_gnn_forward.1} parent=5 // pred_check
        _
      $region10: #{kinome_gnn_forward.1} parent=5 // pred_check_branch
        %222 = sbr.rel (%p219) target = $region12
      $region11: #{kinome_gnn_forward.1} parent=5 // pred_region
        %s223 = ssub.s32 %s14, 1
        // Predicated region
        $region13: #{kinome_gnn_forward.1} parent=11 // pred_check
          %p224 = pneg %p73
        $region14: #{kinome_gnn_forward.1} parent=11 // pred_check_branch
          %226 = sbr.rel (%p224) target = $region16
        $region15: #{kinome_gnn_forward.1} parent=11 // pred_region
          _
        $region16: #{kinome_gnn_forward.1} parent=11 // pred_fallthru
          _
        // Predicated region
        $region17: #{kinome_gnn_forward.1} parent=11 // pred_check
          %p227 = pneg %p146
        $region18: #{kinome_gnn_forward.1} parent=11 // pred_check_branch
          %229 = sbr.rel (%p227) target = $region20
        $region19: #{kinome_gnn_forward.1} parent=11 // pred_region
          _
        $region20: #{kinome_gnn_forward.1} parent=11 // pred_fallthru
          _
        // Predicated region
        $region21: #{kinome_gnn_forward.1} parent=11 // pred_check
          %p230 = pneg %p167
        $region22: #{kinome_gnn_forward.1} parent=11 // pred_check_branch
          %232 = sbr.rel (%p230) target = $region24
        $region23: #{kinome_gnn_forward.1} parent=11 // pred_region
          _
        $region24: #{kinome_gnn_forward.1} parent=11 // pred_fallthru
          _
        // Predicated region
        $region25: #{kinome_gnn_forward.1} parent=11 // pred_check
          %p233 = pneg %p188
        $region26: #{kinome_gnn_forward.1} parent=11 // pred_check_branch
          %235 = sbr.rel (%p233) target = $region28
        $region27: #{kinome_gnn_forward.1} parent=11 // pred_region
          %s237 = ssub.s32 16, 16
          %238 = vsyncadd [#allocation7], %s237
          %s240 = sshll.u32 %s6, 4
          %s241 = int_to_ptr.vmem [resolvable:$true] %s240
          %243 = dma.vmem_to_smem %s241, 16, [#allocation6], [#allocation7]
        $region28: #{kinome_gnn_forward.1} parent=11 // pred_fallthru
          _
      $region12: #{kinome_gnn_forward.1} parent=5 // pred_fallthru
        _
      %p244 = scmp.lt.s32.totalorder %s14, 4
      // Predicated region
      $region29: #{kinome_gnn_forward.1} parent=5 // pred_check
        %p245 = pneg %p244
      $region30: #{kinome_gnn_forward.1} parent=5 // pred_check_branch
        %247 = sbr.rel (%p245) target = $region32
      $region31: #{kinome_gnn_forward.1} parent=5 // pred_region
        // Predicated region
        $region33: #{kinome_gnn_forward.1} parent=31 // pred_check
          %p248 = pneg %p46
        $region34: #{kinome_gnn_forward.1} parent=31 // pred_check_branch
          %250 = sbr.rel (%p248) target = $region36
        $region35: #{kinome_gnn_forward.1} parent=31 // pred_region
          %p251 = scmp.lt.s32.totalorder %s22, 1
          %s252 = scalar_select %p251, %s22, 1
          %s253 = smul.addr %s252, 4
          %s254 = scalar_lea.vmem %s0, %s253
        $region36: #{kinome_gnn_forward.1} parent=31 // pred_fallthru
          _
        // Predicated region
        $region37: #{kinome_gnn_forward.1} parent=31 // pred_check
          %p255 = pneg %p93
        $region38: #{kinome_gnn_forward.1} parent=31 // pred_check_branch
          %257 = sbr.rel (%p255) target = $region40
        $region39: #{kinome_gnn_forward.1} parent=31 // pred_region
          %p258 = scmp.lt.s32.totalorder %s22, 1
          %s259 = scalar_select %p258, %s22, 1
          %s260 = smul.addr %s259, 8
          %s261 = scalar_lea.vmem %s2, %s260
        $region40: #{kinome_gnn_forward.1} parent=31 // pred_fallthru
          _
        // Predicated region
        $region41: #{kinome_gnn_forward.1} parent=31 // pred_check
          %p262 = pneg %p119
        $region42: #{kinome_gnn_forward.1} parent=31 // pred_check_branch
          %264 = sbr.rel (%p262) target = $region44
        $region43: #{kinome_gnn_forward.1} parent=31 // pred_region
          %p265 = scmp.lt.s32.totalorder %s22, 1
          %s266 = scalar_select %p265, %s22, 1
          %s267 = smul.addr %s266, 8
          %s268 = scalar_lea.vmem %s3, %s267
        $region44: #{kinome_gnn_forward.1} parent=31 // pred_fallthru
          _
      $region32: #{kinome_gnn_forward.1} parent=5 // pred_fallthru
        _
      %p269 = scmp.le.s32.totalorder 1, %s14
      %p270 = scmp.lt.s32.totalorder %s14, 5
      %p271 = pnand %p269, %p270
      %p272 = pneg %p271
      // Predicated region
      $region45: #{kinome_gnn_forward.1} parent=5 // pred_check
        _
      $region46: #{kinome_gnn_forward.1} parent=5 // pred_check_branch
        %274 = sbr.rel (%p271) target = $region48
      $region47: #{kinome_gnn_forward.1} parent=5 // pred_region
        %s275 = ssub.s32 %s14, 1
        // Predicated region
        $region49: #{kinome_gnn_forward.1} parent=47 // pred_check
          %p276 = pneg %p188
        $region50: #{kinome_gnn_forward.1} parent=47 // pred_check_branch
          %278 = sbr.rel (%p276) target = $region52
        $region51: #{kinome_gnn_forward.1} parent=47 // pred_region
          %279 = dma.done [#allocation7], 16
        $region52: #{kinome_gnn_forward.1} parent=47 // pred_fallthru
          _
        %280 = sfence
        %p281 = scmp.lt.s32.totalorder %s24, 1
        %s282 = scalar_select %p281, %s24, 1
        %s283 = smul.addr %s282, 4
        %s284 = scalar_lea.vmem %s0, %s283
        %p285 = pneg %p52
        %p286 = pneg %p49
        %p287 = pneg %p73
        %p288 = pneg %p70
        %p289 = scmp.lt.s32.totalorder %s24, 1
        %s290 = scalar_select %p289, %s24, 1
        %s291 = smul.addr %s290, 8
        %s292 = scalar_lea.vmem %s2, %s291
        %p293 = pneg %p99
        %p294 = pneg %p96
        %p295 = scmp.lt.s32.totalorder %s24, 1
        %s296 = scalar_select %p295, %s24, 1
        %s297 = smul.addr %s296, 8
        %s298 = scalar_lea.vmem %s3, %s297
        %p299 = pneg %p125
        %p300 = pneg %p122
        %p301 = pneg %p146
        %p302 = pneg %p143
        %p303 = pneg %p167
        %p304 = pneg %p164
        %p305 = pneg %p188
        %p306 = pneg %p185
        %p307 = pneg %p209
        %p308 = pneg %p206
        %p309 = scmp.lt.s32.totalorder %s24, 1
        %s310 = scalar_select %p309, %s24, 1
        %s311 = smul.addr %s310, 4
        %s312 = scalar_lea.vmem %s0, %s311
        %p313 = scmp.lt.s32.totalorder %s24, 1
        %s314 = scalar_select %p313, %s24, 1
        %s315 = smul.addr %s314, 8
        %s316 = scalar_lea.vmem %s2, %s315
        %p317 = scmp.lt.s32.totalorder %s24, 1
        %s318 = scalar_select %p317, %s24, 1
        %s319 = smul.addr %s318, 8
        %s320 = scalar_lea.vmem %s3, %s319
        %s322 = smul.u32 %s24, 8
        %p323 = scmp.eq.s32.totalorder %s23, 0
        %p324 = scmp.eq.s32.totalorder %s24, 0
        %p325 = pnand %p323, %p324
        %p326 = pneg %p325
        // Predicated region
        $region53: #{kinome_gnn_forward.1} parent=47 // pred_check
          _
        $region54: #{kinome_gnn_forward.1} parent=47 // pred_check_branch
          %328 = sbr.rel (%p325) target = $region56
        $region55: #{kinome_gnn_forward.1} parent=47 // pred_region
          %329 = vst [vmem:[#allocation3] sm:$0x1] -1e+30
          %330 = vst [vmem:[#allocation4] sm:$0x1] 0.0
          %331 = vst [vmem:[#allocation5] sm:$0x1] 0.0
          %332 = vst [vmem:[%s7] sm:$0x1] 0.0
        $region56: #{kinome_gnn_forward.1} parent=47 // pred_fallthru
          _
        // Predicated region
        $region57: #{kinome_gnn_forward.1} parent=47 // pred_check
          %p333 = pneg %p323
        $region58: #{kinome_gnn_forward.1} parent=47 // pred_check_branch
          %335 = sbr.rel (%p333) target = $region60
        $region59: #{kinome_gnn_forward.1} parent=47 // pred_region
          %v336 = vld [vmem:[%s1] sm:$0xff]
          %v337 = vld [vmem:[%s1 + $0x8] sm:$0xff]
          %v338 = vpack.c.bf16 %v337, %v336
          %v339 = vld [vmem:[%s312] sm:$0xf]
          %vm340 = vcmask 130048
          %v342 = vsel %vm340, %v339, 0
          %344 = vmatprep.subr.bf16.mxu0 0
          %345 = vmatpush1.bf16.msra.mxu0 0
          %346 = vmatprep.subr.bf16.mxu0 0
          %347 = vmatpush1.bf16.msra.mxu0 0
          %348 = vmatprep.subr.bf16.mxu0 0
          %349 = vmatpush1.bf16.msra.mxu0 0
          %350 = vmatprep.subr.bf16.mxu0 0
          %351 = vmatpush1.bf16.msra.mxu0 0
          %352 = vmatprep.subr.bf16.mxu0 0
          %353 = vmatpush1.bf16.msra.mxu0 0
          %354 = vmatprep.subr.bf16.mxu0 0
          %355 = vmatpush1.bf16.msra.mxu0 0
          %356 = vmatprep.subr.bf16.mxu0 0
          %357 = vmatpush1.bf16.msra.mxu0 0
          %358 = vmatprep.subr.bf16.mxu0 0
          %359 = vmatpush1.bf16.msra.mxu0 %v338
          %360 = vmatprep.subr.bf16.mxu0 0
          %361 = vmatpush2.bf16.msra.mxu0 0
          %362 = vmatprep.subr.bf16.mxu0 0
          %363 = vmatpush2.bf16.msra.mxu0 0
          %364 = vmatprep.subr.bf16.mxu0 0
          %365 = vmatpush2.bf16.msra.mxu0 0
          %366 = vmatprep.subr.bf16.mxu0 0
          %367 = vmatpush2.bf16.msra.mxu0 0
          %368 = vmatprep.subr.bf16.mxu0 0
          %369 = vmatpush2.bf16.msra.mxu0 0
          %370 = vmatprep.subr.bf16.mxu0 0
          %371 = vmatpush2.bf16.msra.mxu0 0
          %372 = vmatprep.subr.bf16.mxu0 0
          %373 = vmatpush2.bf16.msra.mxu0 0
          %374 = vmatprep.subr.bf16.mxu0 0
          %375 = vmatpush2.bf16.msra.mxu0 0
          %376 = vmatprep.mubr.bf16.mxu0 0
          %377 = vmatmul.mubr.bf16.gmra.mxu0 %v342
          %v378 = vpop.f32.mrf.mxu0
          %v379 = vadd.f32 0.0, %v378
          %v380 = vpop.f32.mrf.mxu0
          %v381 = vpop.f32.mrf.mxu0
          %v382 = vpop.f32.mrf.mxu0
          %383 = vdwg.mxu0
          %v384 = vld [vmem:[%s316] sm:$0xff]
          %v385 = vmul.f32 %v379, %v384
          %s386 = scalar_lea.vmem %s1, %s322
          %v387 = vld [vmem:[%s386] sm:$0xff]
          %v388 = vld [vmem:[%s4] sm:$0x1]
          %390 = vset.pattern.permute.xlu0 0
          %391 = vperm.xlu0 %390, %v385
          %v392 = vpop.permute.xlu0 %391
          %v394 = vlaneseq
          %v395 = vshrl.u32 %v394, 7
          %v396 = vsub.s32 0, %v395
          %v397 = vrot.slane %v388, %v396
          %v398 = vmul.f32 %v392, %v397
          %v399 = vld [vmem:[%s4 + $0x1] sm:$0x1]
          %401 = vset.pattern.permute.xlu0 0
          %402 = vperm.xlu0 %401, %v387
          %v403 = vpop.permute.xlu0 %402
          %v405 = vlaneseq
          %v406 = vshrl.u32 %v405, 7
          %v407 = vsub.s32 0, %v406
          %v408 = vrot.slane %v399, %v407
          %v409 = vmul.f32 %v403, %v408
          %v410 = vadd.f32 %v398, %v409
          %v411 = vld [vmem:[%s4 + $0x2] sm:$0x1]
          %v412 = vlaneseq
          %v413 = vshrl.u32 %v412, 7
          %v414 = vsub.s32 0, %v413
          %v415 = vrot.slane %v411, %v414
          %v416 = vadd.f32 %v410, %v415
          %v417 = vmax.f32 %v416, 0.0
          %s418 = scalar_lea.vmem [#allocation2], %s322
          %vm419 = vcmask 261120
          %420 = vst.msk [vmem:[%s418] sm:$0xff] %vm419, %v417
        $region60: #{kinome_gnn_forward.1} parent=47 // pred_fallthru
          _
        %p421 = scmp.eq.s32.totalorder %s23, 1
        // Predicated region
        $region61: #{kinome_gnn_forward.1} parent=47 // pred_check
          %p422 = pneg %p421
        $region62: #{kinome_gnn_forward.1} parent=47 // pred_check_branch
          %424 = sbr.rel (%p422) target = $region64
        $region63: #{kinome_gnn_forward.1} parent=47 // pred_region
          %v425 = vld [vmem:[#allocation2] sm:$0xff]
          %v426 = vld [vmem:[#allocation2 + $0x8] sm:$0xff]
          %v427 = vld [vmem:[%s312] sm:$0xf]
          %v428 = vpack.c.bf16 %v426, %v425
          %vm429 = vcmask 130048
          %v431 = vsel %vm429, %v427, 0
          %433 = vmatprep.subr.bf16.mxu0 0
          %434 = vmatpush1.bf16.msra.mxu0 0
          %435 = vmatprep.subr.bf16.mxu0 0
          %436 = vmatpush1.bf16.msra.mxu0 0
          %437 = vmatprep.subr.bf16.mxu0 0
          %438 = vmatpush1.bf16.msra.mxu0 0
          %439 = vmatprep.subr.bf16.mxu0 0
          %440 = vmatpush1.bf16.msra.mxu0 0
          %441 = vmatprep.subr.bf16.mxu0 0
          %442 = vmatpush1.bf16.msra.mxu0 0
          %443 = vmatprep.subr.bf16.mxu0 0
          %444 = vmatpush1.bf16.msra.mxu0 0
          %445 = vmatprep.subr.bf16.mxu0 0
          %446 = vmatpush1.bf16.msra.mxu0 0
          %447 = vmatprep.subr.bf16.mxu0 0
          %448 = vmatpush1.bf16.msra.mxu0 %v428
          %449 = vmatprep.subr.bf16.mxu0 0
          %450 = vmatpush2.bf16.msra.mxu0 0
          %451 = vmatprep.subr.bf16.mxu0 0
          %452 = vmatpush2.bf16.msra.mxu0 0
          %453 = vmatprep.subr.bf16.mxu0 0
          %454 = vmatpush2.bf16.msra.mxu0 0
          %455 = vmatprep.subr.bf16.mxu0 0
          %456 = vmatpush2.bf16.msra.mxu0 0
          %457 = vmatprep.subr.bf16.mxu0 0
          %458 = vmatpush2.bf16.msra.mxu0 0
          %459 = vmatprep.subr.bf16.mxu0 0
          %460 = vmatpush2.bf16.msra.mxu0 0
          %461 = vmatprep.subr.bf16.mxu0 0
          %462 = vmatpush2.bf16.msra.mxu0 0
          %463 = vmatprep.subr.bf16.mxu0 0
          %464 = vmatpush2.bf16.msra.mxu0 0
          %465 = vmatprep.mubr.bf16.mxu0 0
          %466 = vmatmul.mubr.bf16.gmra.mxu0 %v431
          %v467 = vpop.f32.mrf.mxu0
          %v468 = vadd.f32 0.0, %v467
          %v469 = vpop.f32.mrf.mxu0
          %v470 = vpop.f32.mrf.mxu0
          %v471 = vpop.f32.mrf.mxu0
          %472 = vdwg.mxu0
          %v473 = vld [vmem:[%s316] sm:$0xff]
          %475 = vset.pattern.permute.xlu0 0
          %476 = vperm.xlu0 %475, %v473
          %v477 = vpop.permute.xlu0 %476
          %v479 = vmul.f32 %v468, %v477
          %s480 = scalar_lea.vmem [#allocation2], %s322
          %v481 = vld [vmem:[%s480] sm:$0xff]
          %v482 = vpack.c.bf16 %v479, %v479
          %v483 = vld [vmem:[%s5] sm:$0xf]
          %v484 = vld [vmem:[%s5 + $0x4] sm:$0xf]
          %v485 = vld [vmem:[%s5 + $0x8] sm:$0xf]
          %v486 = vld [vmem:[%s5 + $0xc] sm:$0xf]
          %v487 = vpack.c.bf16 %v481, %v481
          %v488 = vld [vmem:[%s5 + $0x10] sm:$0xf]
          %v489 = vld [vmem:[%s5 + $0x14] sm:$0xf]
          %v490 = vld [vmem:[%s5 + $0x18] sm:$0xf]
          %v491 = vld [vmem:[%s5 + $0x1c] sm:$0xf]
          %v496 = vunpack.c.l.b16 %v488
          %v497 = vunpack.c.l.b16 %v489
          %v498 = vunpack.c.l.b16 %v490
          %v499 = vunpack.c.l.b16 %v491
          %v500 = vpack.c.b16 %v497, %v496
          %v501 = vpack.c.b16 %v499, %v498
          %vm504 = vcmask 261120
          %v506 = vsel %vm504, %v487, 0
          %508 = vmatprep.subr.bf16.mxu0 0
          %509 = vmatpush1.bf16.msra.mxu0 0
          %510 = vmatprep.subr.bf16.mxu0 0
          %511 = vmatpush1.bf16.msra.mxu0 0
          %512 = vmatprep.subr.bf16.mxu0 0
          %513 = vmatpush1.bf16.msra.mxu0 0
          %514 = vmatprep.subr.bf16.mxu0 0
          %515 = vmatpush1.bf16.msra.mxu0 0
          %516 = vmatprep.subr.bf16.mxu0 0
          %517 = vmatpush1.bf16.msra.mxu0 0
          %518 = vmatprep.subr.bf16.mxu0 0
          %519 = vmatpush1.bf16.msra.mxu0 0
          %520 = vmatprep.subr.bf16.mxu0 0
          %521 = vmatpush1.bf16.msra.mxu0 %v501
          %522 = vmatprep.subr.bf16.mxu0 0
          %523 = vmatpush1.bf16.msra.mxu0 %v500
          %524 = vmatprep.subr.bf16.mxu0 0
          %525 = vmatpush2.bf16.msra.mxu0 0
          %526 = vmatprep.subr.bf16.mxu0 0
          %527 = vmatpush2.bf16.msra.mxu0 0
          %528 = vmatprep.subr.bf16.mxu0 0
          %529 = vmatpush2.bf16.msra.mxu0 0
          %530 = vmatprep.subr.bf16.mxu0 0
          %531 = vmatpush2.bf16.msra.mxu0 0
          %532 = vmatprep.subr.bf16.mxu0 0
          %533 = vmatpush2.bf16.msra.mxu0 0
          %534 = vmatprep.subr.bf16.mxu0 0
          %535 = vmatpush2.bf16.msra.mxu0 0
          %536 = vmatprep.subr.bf16.mxu0 0
          %537 = vmatpush2.bf16.msra.mxu0 0
          %538 = vmatprep.subr.bf16.mxu0 0
          %539 = vmatpush2.bf16.msra.mxu0 0
          %540 = vmatprep.mubr.bf16.mxu0 0
          %541 = vmatmul.mubr.bf16.gmra.mxu0 %v506
          %v542 = vpop.f32.mrf.mxu0
          %v543 = vadd.f32 0.0, %v542
          %v544 = vpop.f32.mrf.mxu0
          %v545 = vpop.f32.mrf.mxu0
          %v546 = vpop.f32.mrf.mxu0
          %547 = vdwg.mxu0
          %v552 = vunpack.c.l.b16 %v483
          %v553 = vunpack.c.l.b16 %v484
          %v554 = vunpack.c.l.b16 %v485
          %v555 = vunpack.c.l.b16 %v486
          %v556 = vpack.c.b16 %v553, %v552
          %v557 = vpack.c.b16 %v555, %v554
          %v561 = vsel %vm504, %v482, 0
          %563 = vmatprep.subr.bf16.mxu0 0
          %564 = vmatpush1.bf16.msra.mxu0 0
          %565 = vmatprep.subr.bf16.mxu0 0
          %566 = vmatpush1.bf16.msra.mxu0 0
          %567 = vmatprep.subr.bf16.mxu0 0
          %568 = vmatpush1.bf16.msra.mxu0 0
          %569 = vmatprep.subr.bf16.mxu0 0
          %570 = vmatpush1.bf16.msra.mxu0 0
          %571 = vmatprep.subr.bf16.mxu0 0
          %572 = vmatpush1.bf16.msra.mxu0 0
          %573 = vmatprep.subr.bf16.mxu0 0
          %574 = vmatpush1.bf16.msra.mxu0 0
          %575 = vmatprep.subr.bf16.mxu0 0
          %576 = vmatpush1.bf16.msra.mxu0 %v557
          %577 = vmatprep.subr.bf16.mxu0 0
          %578 = vmatpush1.bf16.msra.mxu0 %v556
          %579 = vmatprep.subr.bf16.mxu0 0
          %580 = vmatpush2.bf16.msra.mxu0 0
          %581 = vmatprep.subr.bf16.mxu0 0
          %582 = vmatpush2.bf16.msra.mxu0 0
          %583 = vmatprep.subr.bf16.mxu0 0
          %584 = vmatpush2.bf16.msra.mxu0 0
          %585 = vmatprep.subr.bf16.mxu0 0
          %586 = vmatpush2.bf16.msra.mxu0 0
          %587 = vmatprep.subr.bf16.mxu0 0
          %588 = vmatpush2.bf16.msra.mxu0 0
          %589 = vmatprep.subr.bf16.mxu0 0
          %590 = vmatpush2.bf16.msra.mxu0 0
          %591 = vmatprep.subr.bf16.mxu0 0
          %592 = vmatpush2.bf16.msra.mxu0 0
          %593 = vmatprep.subr.bf16.mxu0 0
          %594 = vmatpush2.bf16.msra.mxu0 0
          %595 = vmatprep.mubr.bf16.mxu0 0
          %596 = vmatmul.mubr.bf16.gmra.mxu0 %v561
          %v597 = vpop.f32.mrf.mxu0
          %v598 = vadd.f32 %v543, %v597
          %v599 = vpop.f32.mrf.mxu0
          %v600 = vpop.f32.mrf.mxu0
          %v601 = vpop.f32.mrf.mxu0
          %602 = vdwg.mxu0
          %v603 = vld [vmem:[%s4 + $0x3] sm:$0x1]
          %v604 = vlaneseq
          %v605 = vshrl.u32 %v604, 7
          %v606 = vsub.s32 0, %v605
          %v607 = vrot.slane %v603, %v606
          %v608 = vadd.f32 %v598, %v607
          %v609 = vmax.f32 %v608, 0.0
          %s610 = sld [smem:[#allocation6]]
          %v611 = vld [vmem:[%s4 + $0x4] sm:$0x1]
          %v612 = vlaneseq
          %v613 = vshrl.u32 %v612, 7
          %v614 = vsub.s32 0, %v613
          %v615 = vrot.slane %v611, %v614
          %v616 = vmul.f32 %v609, %v615
          %v617 = vsel %vm504, %v616, 0.0
          %618 = vadd.xlane.f32.xlu0 %v617
          %v619 = vpop.xlane.xlu0 %618
          %v620 = vstv %s610
          %v621 = vadd.f32 %v619, %v620
          %v622 = vld [vmem:[%s4 + $0x5] sm:$0x1]
          %v623 = vlaneseq
          %v624 = vshrl.u32 %v623, 7
          %v625 = vsub.s32 0, %v624
          %v626 = vrot.slane %v622, %v625
          %v627 = vmul.f32 %v609, %v626
          %v628 = vsel %vm504, %v627, 0.0
          %629 = vadd.xlane.f32.xlu0 %v628
          %v630 = vpop.xlane.xlu0 %629
          %v631 = vlaneseq
          %v632 = vand.u32 %v631, 127
          %v633 = vld [vmem:[%s320] sm:$0xff]
          %634 = vset.pattern.permute.xlu0 0
          %635 = vperm.xlu0 %634, %v633
          %v636 = vpop.permute.xlu0 %635
          %vm637 = vcmp.eq.s32.totalorder %v636, %v632
          %v638 = vsel %vm637, 1, 0
          %v639 = vcvt.s32.f32 %v638
          %v640 = vsub.f32 1.0, %v639
          %v641 = vmul.f32 %v640, 1e+30
          %v642 = vsub.f32 %v621, %v641
          %v643 = vrot.slane %v642, 4
          %v644 = vmax.f32 %v642, %v643
          %v645 = vrot.slane %v644, 2
          %v646 = vmax.f32 %v644, %v645
          %v647 = vrot.slane %v646, 1
          %v648 = vmax.f32 %v646, %v647
          %v649 = vld [vmem:[#allocation3] sm:$0x1]
          %v650 = vmax.f32 %v649, %v648
          %v651 = vsub.f32 %v649, %v650
          %v652 = vmul.f32 %v651, 1.442695
          %v653 = vpow.pop %v652
          %v655 = vlaneseq
          %v656 = vshrl.u32 %v655, 7
          %v657 = vsub.s32 0, %v656
          %v658 = vrot.slane %v650, %v657
          %v660 = vmul.f32 %v639, %v658
          %661 = vadd.xlane.f32.xlu0 %v660
          %v662 = vpop.xlane.xlu0 %661
          %v663 = vsub.f32 %v621, %v662
          %v664 = vmul.f32 %v663, 1.442695
          %v665 = vpow.pop %v664
          %v666 = vld [vmem:[#allocation4] sm:$0x1]
          %v667 = vmul.f32 %v653, %v666
          %v668 = vmul.f32 %v665, %v639
          %v669 = vrot.slane %v668, 4
          %v670 = vadd.f32 %v668, %v669
          %v671 = vrot.slane %v670, 2
          %v672 = vadd.f32 %v670, %v671
          %v673 = vrot.slane %v672, 1
          %v674 = vadd.f32 %v672, %v673
          %v675 = vadd.f32 %v667, %v674
          %676 = vst [vmem:[#allocation4] sm:$0x1] %v675
          %v677 = vld [vmem:[#allocation5] sm:$0x1]
          %v678 = vmul.f32 %v653, %v677
          %v679 = vmul.f32 %v665, %v630
          %v680 = vmul.f32 %v679, %v639
          %v681 = vrot.slane %v680, 4
          %v682 = vadd.f32 %v680, %v681
          %v683 = vrot.slane %v682, 2
          %v684 = vadd.f32 %v682, %v683
          %v685 = vrot.slane %v684, 1
          %v686 = vadd.f32 %v684, %v685
          %v687 = vadd.f32 %v678, %v686
          %688 = vst [vmem:[#allocation5] sm:$0x1] %v687
          %689 = vst [vmem:[#allocation3] sm:$0x1] %v650
          %p690 = scmp.eq.s32.totalorder %s24, 1
          // Predicated region
          $region65: #{kinome_gnn_forward.1} parent=63 // pred_check
            %p691 = pneg %p690
          $region66: #{kinome_gnn_forward.1} parent=63 // pred_check_branch
            %693 = sbr.rel (%p691) target = $region68
          $region67: #{kinome_gnn_forward.1} parent=63 // pred_region
            %s694 = sld [smem:[#allocation6 + $0x1]]
            %v695 = vld [vmem:[#allocation4] sm:$0x1]
            %v696 = vmax.f32 %v695, 1e-30
            %v697 = vld [vmem:[#allocation5] sm:$0x1]
            %v698 = vrcp.pop %v696
            %v699 = vmul.f32 %v697, %v698
            %v700 = vstv %s694
            %v701 = vadd.f32 %v699, %v700
            %v702 = vxor.u32 %v701, 2147483648
            %v703 = vmul.f32 %v702, 1.442695
            %v704 = vpow.pop %v703
            %v705 = vadd.f32 %v704, 1.0
            %v706 = vrcp.pop %v705
            %v707 = vmul.f32 1.0, %v706
            %708 = vst [vmem:[%s7] sm:$0x1] %v707
          $region68: #{kinome_gnn_forward.1} parent=63 // pred_fallthru
            _
        $region64: #{kinome_gnn_forward.1} parent=47 // pred_fallthru
          _
        // Predicated region
        $region69: #{kinome_gnn_forward.1} parent=47 // pred_check
          %p709 = pneg %p206
        $region70: #{kinome_gnn_forward.1} parent=47 // pred_check_branch
          %711 = sbr.rel (%p709) target = $region72
        $region71: #{kinome_gnn_forward.1} parent=47 // pred_region
          _
        $region72: #{kinome_gnn_forward.1} parent=47 // pred_fallthru
          _
        // Predicated region
        $region73: #{kinome_gnn_forward.1} parent=47 // pred_check
          %p712 = pneg %p206
        $region74: #{kinome_gnn_forward.1} parent=47 // pred_check_branch
          %714 = sbr.rel (%p712) target = $region76
        $region75: #{kinome_gnn_forward.1} parent=47 // pred_region
          _
        $region76: #{kinome_gnn_forward.1} parent=47 // pred_fallthru
          _
      $region48: #{kinome_gnn_forward.1} parent=5 // pred_fallthru
        _
      %p715 = scmp.le.s32.totalorder 2, %s14
      // Predicated region
      $region77: #{kinome_gnn_forward.1} parent=5 // pred_check
        %p716 = pneg %p715
      $region78: #{kinome_gnn_forward.1} parent=5 // pred_check_branch
        %718 = sbr.rel (%p716) target = $region80
      $region79: #{kinome_gnn_forward.1} parent=5 // pred_region
        %s719 = ssub.s32 %s14, 2
      $region80: #{kinome_gnn_forward.1} parent=5 // pred_fallthru
        _
    $region6: #{kinome_gnn_forward.1} parent=1 // loop_footer
      %s18 = sadd.s32 1, %s14
    $region7: #{kinome_gnn_forward.1} parent=1 // loop_footer_branch
      %13 = sbr.rel target = $region3
    $region8: #{kinome_gnn_forward.1} parent=1 // loop_exit
      _
    %720 = vsyncpa [#allocation7], 1
    %s721 = scalar_lea.sflag [#allocation7], 1
    %722 = vsyncpa %s721, 1

</llo_original>
